<compile_context>
chip_gen: v6e
topology: v6e:2x2x1
jax: 0.10.0
libtpu: 0.0.40
codegen_flags: <defaults>
</compile_context>

<pallas_src>
import functools

import jax
import jax.numpy as jnp
from jax.experimental import pallas as pl
from jax.experimental.pallas import tpu as pltpu


def generator_kernel(x_ref, w1_ref, b1_ref, w2_ref, b2_ref, w3_ref, b3_ref,
                     o_ref):
    """One batch-row tile of the 3-layer MLP, entirely in VMEM."""
    # Cast x to bf16 on the VPU (free — kernel is nowhere near VALU-bound);
    # MXU accumulates in f32 via preferred_element_type.
    x = x_ref[...].astype(jnp.bfloat16)

    # Layer 1: Linear(input_shape, 128) + LeakyReLU(0.1)
    h = jnp.dot(x, w1_ref[...], preferred_element_type=jnp.float32)
    h = h + b1_ref[...]
    h = jnp.maximum(h, 0.1 * h)

    # Layer 2: Linear(128, 256) + LeakyReLU(0.1)
    h = jnp.dot(h.astype(jnp.bfloat16), w2_ref[...],
                preferred_element_type=jnp.float32)
    h = h + b2_ref[...]
    h = jnp.maximum(h, 0.1 * h)

    # Layer 3: Linear(256, output_shape) + Tanh
    h = jnp.dot(h.astype(jnp.bfloat16), w3_ref[...],
                preferred_element_type=jnp.float32)
    h = h + b3_ref[...]
    o_ref[...] = jnp.tanh(h).astype(o_ref.dtype)


def _pick_batch_tile(batch):
    """Row-tile size: as large as possible.

    * batch <= 1024: one block covering everything (grid=(1,)) — per-step
      overhead (~0.35 us) would otherwise dominate the ~30 ns of MXU work.
    * bigger batches: largest tile (<= 1024 rows) that still leaves >= ~8
      grid steps so each of v7x's 2 TensorCores gets >= 4 steps of
      compute/DMA overlap.
    """
    if batch <= 1024:
        return batch
    tm = (batch // 8) // 8 * 8          # ~batch/8, rounded down to sublane mult
    return max(128, min(1024, tm))


@functools.partial(jax.jit, static_argnames=("out_dtype",))
def generator_forward(x, w1, b1, w2, b2, w3, b3, out_dtype=None):
    batch, in_dim = x.shape
    out_dim = w3.shape[1]
    out_dtype = x.dtype if out_dtype is None else out_dtype

    tm = _pick_batch_tile(batch)
    grid = (pl.cdiv(batch, tm),)        # partial last block is masked by Pallas

    # Constant index_map => weights/biases stay VMEM-resident across steps.
    resident = lambda arr: pl.BlockSpec(arr.shape, lambda i: (0, 0))

    return pl.pallas_call(
        generator_kernel,
        out_shape=jax.ShapeDtypeStruct((batch, out_dim), out_dtype),
        grid_spec=pltpu.PrefetchScalarGridSpec(
            num_scalar_prefetch=0,
            grid=grid,
            in_specs=[
                pl.BlockSpec((tm, in_dim), lambda i: (i, 0)),  # x row tile
                resident(w1), resident(b1),
                resident(w2), resident(b2),
                resident(w3), resident(b3),
            ],
            out_specs=pl.BlockSpec((tm, out_dim), lambda i: (i, 0)),
        ),
        compiler_params=pltpu.CompilerParams(
            dimension_semantics=("parallel",)),
    )(x, w1, b1, w2, b2, w3, b3)


def init_params(key, input_shape, output_shape):
    """Init matching PyTorch Linear's U(-1/sqrt(fan_in), 1/sqrt(fan_in)).

    Weights are cast to bf16 ONCE here (persistently stored in the MXU input
    dtype); biases stay f32.  Note: bf16 matmul operands diverge slightly
    from the PyTorch module's f32 math (covered by the 1e-2 tolerance).
    """
    dims = [(input_shape, 128), (128, 256), (256, output_shape)]
    params = []
    for fan_in, fan_out in dims:
        kw, kb, key = jax.random.split(key, 3)
        bound = 1.0 / jnp.sqrt(fan_in)
        w = jax.random.uniform(kw, (fan_in, fan_out), jnp.float32,
                               minval=-bound, maxval=bound)
        b = jax.random.uniform(kb, (1, fan_out), jnp.float32,
                               minval=-bound, maxval=bound)
        params += [w.astype(jnp.bfloat16), b]
    return params


def reference_forward(x, w1, b1, w2, b2, w3, b3):
    """Plain-JAX reference with matching bf16 matmul operands / f32 accum."""
    h = jnp.dot(x.astype(jnp.bfloat16), w1,
                preferred_element_type=jnp.float32) + b1
    h = jnp.maximum(h, 0.1 * h)
    h = jnp.dot(h.astype(jnp.bfloat16), w2,
                preferred_element_type=jnp.float32) + b2
    h = jnp.maximum(h, 0.1 * h)
    h = jnp.dot(h.astype(jnp.bfloat16), w3,
                preferred_element_type=jnp.float32) + b3
    return jnp.tanh(h)


if __name__ == "__main__":
    key = jax.random.PRNGKey(0)

    batch = 256           # small demo batch -> single block, grid=(1,)
    input_shape = 64      # latent / noise dimension fed to the Generator
    output_shape = 256    # generated sample dimension

    kx, kp = jax.random.split(key)
    x = jax.random.normal(kx, (batch, input_shape), jnp.float32)
    params = init_params(kp, input_shape, output_shape)

    out = jax.block_until_ready(generator_forward(x, *params))

    ref = reference_forward(x, *params)
    assert out.shape == (batch, output_shape), out.shape
    assert out.dtype == x.dtype, out.dtype
    assert jnp.allclose(out, ref, atol=1e-2, rtol=1e-2), \
        float(jnp.max(jnp.abs(out - ref)))

    print("KERNEL_OK")
</pallas_src>

<mosaic_0001>
module attributes {stable_mosaic.version = 11 : i64} {
  func.func @generator_kernel(%arg0: i32, %arg1: memref<256x64xf32, #tpu.memory_space<vmem>>, %arg2: memref<64x128xbf16, #tpu.memory_space<vmem>>, %arg3: memref<1x128xf32, #tpu.memory_space<vmem>>, %arg4: memref<128x256xbf16, #tpu.memory_space<vmem>>, %arg5: memref<1x256xf32, #tpu.memory_space<vmem>>, %arg6: memref<256x256xbf16, #tpu.memory_space<vmem>>, %arg7: memref<1x256xf32, #tpu.memory_space<vmem>>, %arg8: memref<256x256xf32, #tpu.memory_space<vmem>>) attributes {dimension_semantics = [#tpu.dimension_semantics<parallel>], iteration_bounds = array<i64: 1>, scalar_prefetch = 0 : i64, scratch_operands = 0 : i64, tpu.core_type = #tpu.core_type<tc>, window_params = [{transform_indices = @transform_0, window_bounds = array<i64: 256, 64>}, {pipeline_mode = #tpu.pipeline_mode<synchronous>, transform_indices = @transform_1, window_bounds = array<i64: 64, 128>}, {pipeline_mode = #tpu.pipeline_mode<synchronous>, transform_indices = @transform_2, window_bounds = array<i64: 1, 128>}, {pipeline_mode = #tpu.pipeline_mode<synchronous>, transform_indices = @transform_3, window_bounds = array<i64: 128, 256>}, {pipeline_mode = #tpu.pipeline_mode<synchronous>, transform_indices = @transform_4, window_bounds = array<i64: 1, 256>}, {pipeline_mode = #tpu.pipeline_mode<synchronous>, transform_indices = @transform_5, window_bounds = array<i64: 256, 256>}, {pipeline_mode = #tpu.pipeline_mode<synchronous>, transform_indices = @transform_6, window_bounds = array<i64: 1, 256>}, {transform_indices = @transform_7, window_bounds = array<i64: 256, 256>}]} {
    %c0 = arith.constant 0 : index
    %c0_0 = arith.constant 0 : index
    %0 = vector.load %arg1[%c0, %c0_0] : memref<256x64xf32, #tpu.memory_space<vmem>>, vector<256x64xf32>
    %1 = arith.truncf %0 : vector<256x64xf32> to vector<256x64xbf16>
    %c0_1 = arith.constant 0 : index
    %c0_2 = arith.constant 0 : index
    %2 = vector.load %arg2[%c0_1, %c0_2] : memref<64x128xbf16, #tpu.memory_space<vmem>>, vector<64x128xbf16>
    %cst = arith.constant dense<0.000000e+00> : vector<256x128xf32>
    %3 = tpu.matmul %1, %2, %cst {dimension_numbers = #tpu.dot_dimension_numbers<[1], [0], [0], [1], [0, 0, 1, 1], [], []>} : vector<256x64xbf16>, vector<64x128xbf16>, vector<256x128xf32> -> vector<256x128xf32>
    %c0_3 = arith.constant 0 : index
    %c0_4 = arith.constant 0 : index
    %4 = vector.load %arg3[%c0_3, %c0_4] : memref<1x128xf32, #tpu.memory_space<vmem>>, vector<1x128xf32>
    %5 = vector.broadcast %4 : vector<1x128xf32> to vector<256x128xf32>
    %6 = arith.addf %3, %5 : vector<256x128xf32>
    %cst_5 = arith.constant 1.000000e-01 : f32
    %7 = vector.broadcast %cst_5 : f32 to vector<256x128xf32>
    %8 = arith.mulf %7, %6 : vector<256x128xf32>
    %9 = arith.maximumf %6, %8 : vector<256x128xf32>
    %10 = arith.truncf %9 : vector<256x128xf32> to vector<256x128xbf16>
    %c0_6 = arith.constant 0 : index
    %c0_7 = arith.constant 0 : index
    %11 = vector.load %arg4[%c0_6, %c0_7] : memref<128x256xbf16, #tpu.memory_space<vmem>>, vector<128x256xbf16>
    %cst_8 = arith.constant dense<0.000000e+00> : vector<256x256xf32>
    %12 = tpu.matmul %10, %11, %cst_8 {dimension_numbers = #tpu.dot_dimension_numbers<[1], [0], [0], [1], [0, 0, 1, 1], [], []>} : vector<256x128xbf16>, vector<128x256xbf16>, vector<256x256xf32> -> vector<256x256xf32>
    %c0_9 = arith.constant 0 : index
    %c0_10 = arith.constant 0 : index
    %13 = vector.load %arg5[%c0_9, %c0_10] : memref<1x256xf32, #tpu.memory_space<vmem>>, vector<1x256xf32>
    %14 = vector.broadcast %13 : vector<1x256xf32> to vector<256x256xf32>
    %15 = arith.addf %12, %14 : vector<256x256xf32>
    %cst_11 = arith.constant 1.000000e-01 : f32
    %16 = vector.broadcast %cst_11 : f32 to vector<256x256xf32>
    %17 = arith.mulf %16, %15 : vector<256x256xf32>
    %18 = arith.maximumf %15, %17 : vector<256x256xf32>
    %19 = arith.truncf %18 : vector<256x256xf32> to vector<256x256xbf16>
    %c0_12 = arith.constant 0 : index
    %c0_13 = arith.constant 0 : index
    %20 = vector.load %arg6[%c0_12, %c0_13] : memref<256x256xbf16, #tpu.memory_space<vmem>>, vector<256x256xbf16>
    %cst_14 = arith.constant dense<0.000000e+00> : vector<256x256xf32>
    %21 = tpu.matmul %19, %20, %cst_14 {dimension_numbers = #tpu.dot_dimension_numbers<[1], [0], [0], [1], [0, 0, 1, 1], [], []>} : vector<256x256xbf16>, vector<256x256xbf16>, vector<256x256xf32> -> vector<256x256xf32>
    %c0_15 = arith.constant 0 : index
    %c0_16 = arith.constant 0 : index
    %22 = vector.load %arg7[%c0_15, %c0_16] : memref<1x256xf32, #tpu.memory_space<vmem>>, vector<1x256xf32>
    %23 = vector.broadcast %22 : vector<1x256xf32> to vector<256x256xf32>
    %24 = arith.addf %21, %23 : vector<256x256xf32>
    %25 = math.tanh %24 : vector<256x256xf32>
    %c0_17 = arith.constant 0 : index
    %c0_18 = arith.constant 0 : index
    %26 = vector.load %arg8[%c0_17, %c0_18] : memref<256x256xf32, #tpu.memory_space<vmem>>, vector<256x256xf32>
    tpu.vector_store %arg8[%c0_17, %c0_18], %25 {strides = array<i32>} : memref<256x256xf32, #tpu.memory_space<vmem>>, vector<256x256xf32>,
    return
  }
  func.func @transform_0(%arg0: i32) -> (i32, i32) {
    %c0_i32 = arith.constant 0 : i32
    %c0_i32_0 = arith.constant 0 : i32
    return %arg0, %c0_i32 : i32, i32
  }
  func.func @transform_1(%arg0: i32) -> (i32, i32) {
    %c0_i32 = arith.constant 0 : i32
    %c0_i32_0 = arith.constant 0 : i32
    %c0_i32_1 = arith.constant 0 : i32
    return %c0_i32, %c0_i32_0 : i32, i32
  }
  func.func @transform_2(%arg0: i32) -> (i32, i32) {
    %c0_i32 = arith.constant 0 : i32
    %c0_i32_0 = arith.constant 0 : i32
    %c0_i32_1 = arith.constant 0 : i32
    return %c0_i32, %c0_i32_0 : i32, i32
  }
  func.func @transform_3(%arg0: i32) -> (i32, i32) {
    %c0_i32 = arith.constant 0 : i32
    %c0_i32_0 = arith.constant 0 : i32
    %c0_i32_1 = arith.constant 0 : i32
    return %c0_i32, %c0_i32_0 : i32, i32
  }
  func.func @transform_4(%arg0: i32) -> (i32, i32) {
    %c0_i32 = arith.constant 0 : i32
    %c0_i32_0 = arith.constant 0 : i32
    %c0_i32_1 = arith.constant 0 : i32
    return %c0_i32, %c0_i32_0 : i32, i32
  }
  func.func @transform_5(%arg0: i32) -> (i32, i32) {
    %c0_i32 = arith.constant 0 : i32
    %c0_i32_0 = arith.constant 0 : i32
    %c0_i32_1 = arith.constant 0 : i32
    return %c0_i32, %c0_i32_0 : i32, i32
  }
  func.func @transform_6(%arg0: i32) -> (i32, i32) {
    %c0_i32 = arith.constant 0 : i32
    %c0_i32_0 = arith.constant 0 : i32
    %c0_i32_1 = arith.constant 0 : i32
    return %c0_i32, %c0_i32_0 : i32, i32
  }
  func.func @transform_7(%arg0: i32) -> (i32, i32) {
    %c0_i32 = arith.constant 0 : i32
    %c0_i32_0 = arith.constant 0 : i32
    return %arg0, %c0_i32 : i32, i32
  }
}

</mosaic_0001>

<llo_original>
// kernel: generator_forward.1
$region0: #{generator_forward.1}
  #allocation0 [shape = 'u32[]', space=smem, size = 0x4, offset = 0x4, fixed_abs, tag = 'smem constant byte address 0x4 - core index']
  #allocation1 [shape = 'u32[144,128]{1,0:T(1,128)}', space=vmem, size = 0x12000, scoped, tag = 'internal scratch']
  %s0 = inlined_call_operand.vmem [shape: f32[256,64], index: 0, kind: input, shape index: {}]
  %s1 = inlined_call_operand.hbm [shape: bf16[64,128], index: 1, kind: input, shape index: {}]
  %s2 = inlined_call_operand.vmem [shape: f32[1,128], index: 2, kind: input, shape index: {}]
  %s3 = inlined_call_operand.vmem [shape: bf16[128,256], index: 3, kind: input, shape index: {}]
  %s4 = inlined_call_operand.vmem [shape: f32[1,256], index: 4, kind: input, shape index: {}]
  %s5 = inlined_call_operand.vmem [shape: bf16[256,256], index: 5, kind: input, shape index: {}]
  %s6 = inlined_call_operand.vmem [shape: f32[1,256], index: 6, kind: input, shape index: {}]
  %s7 = inlined_call_operand.hbm [shape: f32[256,256], index: 7, kind: output, shape index: {}]
  %s8 = sld [smem:[#allocation0]]
  $region42: #{generator_forward.1} parent=0
    _
  %s10 = ssub.s32 1, %s8
  %s11 = scalar_select 0, %s10, %s8
  $region1: #{generator_forward.1} parent=0
    #allocation2 [shape = 'u8[16384]{0}', space=vmem, size = 0x4000, scoped, tag = 'input window, operand 1, single buffered']
    #allocation3 [shape = 's32[1]{0}', space=sflag, size = 0x4, scoped, tag = 'scoped memory for generator_forward.1']
    #allocation4 [shape = 's32[1]{0}', space=sflag, size = 0x4, scoped, tag = 'scoped memory for generator_forward.1']
    #allocation5 [shape = 'u8[262144]{0}', space=vmem, size = 0x40000, scoped, tag = 'output window, operand 0, single buffered']
    %12 = vsyncpa [#allocation3], 0
    %13 = vsyncpa [#allocation4], 0
    // Predicated region
    $region2: #{generator_forward.1} parent=1 // pred_check
      _
    $region3: #{generator_forward.1} parent=1 // pred_check_branch
      %15 = sbr.rel (0) target = $region5
    $region4: #{generator_forward.1} parent=1 // pred_region
      _
    $region5: #{generator_forward.1} parent=1 // pred_fallthru
      _
    // Predicated region
    $region6: #{generator_forward.1} parent=1 // pred_check
      _
    $region7: #{generator_forward.1} parent=1 // pred_check_branch
      %17 = sbr.rel (0) target = $region9
    $region8: #{generator_forward.1} parent=1 // pred_region
      %s19 = ssub.s32 512, 512
      %20 = vsyncadd [#allocation3], %s19
      %s21 = sshll.u32 [#allocation2], 4
      %s22 = int_to_ptr.vmem [resolvable:$true] %s21
      %27 = dma.hbm_to_vmem [thread:$0]  %s1, 512, %s22, [#allocation3], 64, 64, 4
    $region9: #{generator_forward.1} parent=1 // pred_fallthru
      _
    // Predicated region
    $region10: #{generator_forward.1} parent=1 // pred_check
      _
    $region11: #{generator_forward.1} parent=1 // pred_check_branch
      %29 = sbr.rel (0) target = $region13
    $region12: #{generator_forward.1} parent=1 // pred_region
      _
    $region13: #{generator_forward.1} parent=1 // pred_fallthru
      _
    // Predicated region
    $region14: #{generator_forward.1} parent=1 // pred_check
      _
    $region15: #{generator_forward.1} parent=1 // pred_check_branch
      %31 = sbr.rel (0) target = $region17
    $region16: #{generator_forward.1} parent=1 // pred_region
      _
    $region17: #{generator_forward.1} parent=1 // pred_fallthru
      _
    // Predicated region
    $region18: #{generator_forward.1} parent=1 // pred_check
      _
    $region19: #{generator_forward.1} parent=1 // pred_check_branch
      %33 = sbr.rel (0) target = $region21
    $region20: #{generator_forward.1} parent=1 // pred_region
      _
    $region21: #{generator_forward.1} parent=1 // pred_fallthru
      _
    // Predicated region
    $region22: #{generator_forward.1} parent=1 // pred_check
      _
    $region23: #{generator_forward.1} parent=1 // pred_check_branch
      %35 = sbr.rel (0) target = $region25
    $region24: #{generator_forward.1} parent=1 // pred_region
      _
    $region25: #{generator_forward.1} parent=1 // pred_fallthru
      _
    // Predicated region
    $region26: #{generator_forward.1} parent=1 // pred_check
      _
    $region27: #{generator_forward.1} parent=1 // pred_check_branch
      %37 = sbr.rel (0) target = $region29
    $region28: #{generator_forward.1} parent=1 // pred_region
      _
    $region29: #{generator_forward.1} parent=1 // pred_fallthru
      _
    // Predicated region
    $region30: #{generator_forward.1} parent=1 // pred_check
      _
    $region31: #{generator_forward.1} parent=1 // pred_check_branch
      %39 = sbr.rel (0) target = $region33
    $region32: #{generator_forward.1} parent=1 // pred_region
      %40 = dma.done [#allocation3], 512
    $region33: #{generator_forward.1} parent=1 // pred_fallthru
      _
    %v42 = vld [vmem:[%s0] sm:$0xff]
    %v43 = vld [vmem:[%s0 + $0x8] sm:$0xff]
    %v44 = vld [vmem:[%s0 + $0x10] sm:$0xff]
    %v45 = vld [vmem:[%s0 + $0x18] sm:$0xff]
    %v46 = vld [vmem:[%s0 + $0x20] sm:$0xff]
    %v47 = vld [vmem:[%s0 + $0x28] sm:$0xff]
    %v48 = vld [vmem:[%s0 + $0x30] sm:$0xff]
    %v49 = vld [vmem:[%s0 + $0x38] sm:$0xff]
    %v50 = vld [vmem:[%s0 + $0x40] sm:$0xff]
    %v51 = vld [vmem:[%s0 + $0x48] sm:$0xff]
    %v52 = vld [vmem:[%s0 + $0x50] sm:$0xff]
    %v53 = vld [vmem:[%s0 + $0x58] sm:$0xff]
    %v54 = vld [vmem:[%s0 + $0x60] sm:$0xff]
    %v55 = vld [vmem:[%s0 + $0x68] sm:$0xff]
    %v56 = vld [vmem:[%s0 + $0x70] sm:$0xff]
    %v57 = vld [vmem:[%s0 + $0x78] sm:$0xff]
    %v58 = vld [vmem:[%s0 + $0x80] sm:$0xff]
    %v59 = vld [vmem:[%s0 + $0x88] sm:$0xff]
    %v60 = vld [vmem:[%s0 + $0x90] sm:$0xff]
    %v61 = vld [vmem:[%s0 + $0x98] sm:$0xff]
    %v62 = vld [vmem:[%s0 + $0xa0] sm:$0xff]
    %v63 = vld [vmem:[%s0 + $0xa8] sm:$0xff]
    %v64 = vld [vmem:[%s0 + $0xb0] sm:$0xff]
    %v65 = vld [vmem:[%s0 + $0xb8] sm:$0xff]
    %v66 = vld [vmem:[%s0 + $0xc0] sm:$0xff]
    %v67 = vld [vmem:[%s0 + $0xc8] sm:$0xff]
    %v68 = vld [vmem:[%s0 + $0xd0] sm:$0xff]
    %v69 = vld [vmem:[%s0 + $0xd8] sm:$0xff]
    %v70 = vld [vmem:[%s0 + $0xe0] sm:$0xff]
    %v71 = vld [vmem:[%s0 + $0xe8] sm:$0xff]
    %v72 = vld [vmem:[%s0 + $0xf0] sm:$0xff]
    %v73 = vld [vmem:[%s0 + $0xf8] sm:$0xff]
    %v74 = vpack.c.bf16 %v43, %v42
    %v75 = vpack.c.bf16 %v45, %v44
    %v76 = vpack.c.bf16 %v47, %v46
    %v77 = vpack.c.bf16 %v49, %v48
    %v78 = vpack.c.bf16 %v51, %v50
    %v79 = vpack.c.bf16 %v53, %v52
    %v80 = vpack.c.bf16 %v55, %v54
    %v81 = vpack.c.bf16 %v57, %v56
    %v82 = vpack.c.bf16 %v59, %v58
    %v83 = vpack.c.bf16 %v61, %v60
    %v84 = vpack.c.bf16 %v63, %v62
    %v85 = vpack.c.bf16 %v65, %v64
    %v86 = vpack.c.bf16 %v67, %v66
    %v87 = vpack.c.bf16 %v69, %v68
    %v88 = vpack.c.bf16 %v71, %v70
    %v89 = vpack.c.bf16 %v73, %v72
    %v90 = vld [vmem:[#allocation2] sm:$0xf]
    %v91 = vld [vmem:[#allocation2 + $0x4] sm:$0xf]
    %v92 = vld [vmem:[#allocation2 + $0x8] sm:$0xf]
    %v93 = vld [vmem:[#allocation2 + $0xc] sm:$0xf]
    %v94 = vld [vmem:[#allocation2 + $0x10] sm:$0xf]
    %v95 = vld [vmem:[#allocation2 + $0x14] sm:$0xf]
    %v96 = vld [vmem:[#allocation2 + $0x18] sm:$0xf]
    %v97 = vld [vmem:[#allocation2 + $0x1c] sm:$0xf]
    %v98 = vld [vmem:[%s2] sm:$0x1]
    %v100 = vlaneseq
    %v101 = vshrl.u32 %v100, 7
    %v102 = vsub.s32 0, %v101
    %v103 = vrot.slane %v98, %v102
    %v113 = vunpack.c.l.b16 %v90
    %v114 = vunpack.c.l.b16 %v91
    %v115 = vunpack.c.l.b16 %v92
    %v116 = vunpack.c.l.b16 %v93
    %v117 = vunpack.c.l.b16 %v94
    %v118 = vunpack.c.l.b16 %v95
    %v119 = vunpack.c.l.b16 %v96
    %v120 = vunpack.c.l.b16 %v97
    %v121 = vpack.c.b16 %v114, %v113
    %v122 = vpack.c.b16 %v116, %v115
    %v123 = vpack.c.b16 %v118, %v117
    %v124 = vpack.c.b16 %v120, %v119
    %vm129 = vcmask 523264
    %v131 = vsel %vm129, %v74, 0
    %v134 = vsel %vm129, %v75, 0
    %v137 = vsel %vm129, %v76, 0
    %v140 = vsel %vm129, %v77, 0
    %v143 = vsel %vm129, %v78, 0
    %v146 = vsel %vm129, %v79, 0
    %v149 = vsel %vm129, %v80, 0
    %v152 = vsel %vm129, %v81, 0
    %v155 = vsel %vm129, %v82, 0
    %v158 = vsel %vm129, %v83, 0
    %v161 = vsel %vm129, %v84, 0
    %v164 = vsel %vm129, %v85, 0
    %v167 = vsel %vm129, %v86, 0
    %v170 = vsel %vm129, %v87, 0
    %v173 = vsel %vm129, %v88, 0
    %v176 = vsel %vm129, %v89, 0
    %178 = vmatprep.subr.bf16.mxu0 0
    %179 = vmatpush1.bf16.msra.mxu0 0
    %180 = vmatprep.subr.bf16.mxu0 0
    %181 = vmatpush1.bf16.msra.mxu0 0
    %182 = vmatprep.subr.bf16.mxu0 0
    %183 = vmatpush1.bf16.msra.mxu0 0
    %184 = vmatprep.subr.bf16.mxu0 0
    %185 = vmatpush1.bf16.msra.mxu0 0
    %186 = vmatprep.subr.bf16.mxu0 0
    %187 = vmatpush1.bf16.msra.mxu0 %v124
    %188 = vmatprep.subr.bf16.mxu0 0
    %189 = vmatpush1.bf16.msra.mxu0 %v123
    %190 = vmatprep.subr.bf16.mxu0 0
    %191 = vmatpush1.bf16.msra.mxu0 %v122
    %192 = vmatprep.subr.bf16.mxu0 0
    %193 = vmatpush1.bf16.msra.mxu0 %v121
    %194 = vmatprep.subr.bf16.mxu0 0
    %195 = vmatpush2.bf16.msra.mxu0 0
    %196 = vmatprep.subr.bf16.mxu0 0
    %197 = vmatpush2.bf16.msra.mxu0 0
    %198 = vmatprep.subr.bf16.mxu0 0
    %199 = vmatpush2.bf16.msra.mxu0 0
    %200 = vmatprep.subr.bf16.mxu0 0
    %201 = vmatpush2.bf16.msra.mxu0 0
    %202 = vmatprep.subr.bf16.mxu0 0
    %203 = vmatpush2.bf16.msra.mxu0 0
    %204 = vmatprep.subr.bf16.mxu0 0
    %205 = vmatpush2.bf16.msra.mxu0 0
    %206 = vmatprep.subr.bf16.mxu0 0
    %207 = vmatpush2.bf16.msra.mxu0 0
    %208 = vmatprep.subr.bf16.mxu0 0
    %209 = vmatpush2.bf16.msra.mxu0 0
    %210 = vmatprep.mubr.bf16.mxu0 0
    %211 = vmatmul.mubr.bf16.gmra.mxu0 %v131
    %v212 = vpop.f32.mrf.mxu0
    %v213 = vadd.f32 %v103, %v212
    %v214 = vpop.f32.mrf.mxu0
    %v215 = vpop.f32.mrf.mxu0
    %v216 = vadd.f32 %v103, %v215
    %v217 = vpop.f32.mrf.mxu0
    %218 = vmatprep.mubr.bf16.mxu0 0
    %219 = vmatmul.mubr.bf16.gmra.mxu0 %v134
    %v220 = vpop.f32.mrf.mxu0
    %v221 = vadd.f32 %v103, %v220
    %v222 = vpop.f32.mrf.mxu0
    %v223 = vpop.f32.mrf.mxu0
    %v224 = vadd.f32 %v103, %v223
    %v225 = vpop.f32.mrf.mxu0
    %226 = vmatprep.mubr.bf16.mxu0 0
    %227 = vmatmul.mubr.bf16.gmra.mxu0 %v137
    %v228 = vpop.f32.mrf.mxu0
    %v229 = vadd.f32 %v103, %v228
    %v230 = vpop.f32.mrf.mxu0
    %v231 = vpop.f32.mrf.mxu0
    %v232 = vadd.f32 %v103, %v231
    %v233 = vpop.f32.mrf.mxu0
    %234 = vmatprep.mubr.bf16.mxu0 0
    %235 = vmatmul.mubr.bf16.gmra.mxu0 %v140
    %v236 = vpop.f32.mrf.mxu0
    %v237 = vadd.f32 %v103, %v236
    %v238 = vpop.f32.mrf.mxu0
    %v239 = vpop.f32.mrf.mxu0
    %v240 = vadd.f32 %v103, %v239
    %v241 = vpop.f32.mrf.mxu0
    %242 = vmatprep.mubr.bf16.mxu0 0
    %243 = vmatmul.mubr.bf16.gmra.mxu0 %v143
    %v244 = vpop.f32.mrf.mxu0
    %v245 = vadd.f32 %v103, %v244
    %v246 = vpop.f32.mrf.mxu0
    %v247 = vpop.f32.mrf.mxu0
    %v248 = vadd.f32 %v103, %v247
    %v249 = vpop.f32.mrf.mxu0
    %250 = vmatprep.mubr.bf16.mxu0 0
    %251 = vmatmul.mubr.bf16.gmra.mxu0 %v146
    %v252 = vpop.f32.mrf.mxu0
    %v253 = vadd.f32 %v103, %v252
    %v254 = vpop.f32.mrf.mxu0
    %v255 = vpop.f32.mrf.mxu0
    %v256 = vadd.f32 %v103, %v255
    %v257 = vpop.f32.mrf.mxu0
    %258 = vmatprep.mubr.bf16.mxu0 0
    %259 = vmatmul.mubr.bf16.gmra.mxu0 %v149
    %v260 = vpop.f32.mrf.mxu0
    %v261 = vadd.f32 %v103, %v260
    %v262 = vpop.f32.mrf.mxu0
    %v263 = vpop.f32.mrf.mxu0
    %v264 = vadd.f32 %v103, %v263
    %v265 = vpop.f32.mrf.mxu0
    %266 = vmatprep.mubr.bf16.mxu0 0
    %267 = vmatmul.mubr.bf16.gmra.mxu0 %v152
    %v268 = vpop.f32.mrf.mxu0
    %v269 = vadd.f32 %v103, %v268
    %v270 = vpop.f32.mrf.mxu0
    %v271 = vpop.f32.mrf.mxu0
    %v272 = vadd.f32 %v103, %v271
    %v273 = vpop.f32.mrf.mxu0
    %274 = vmatprep.mubr.bf16.mxu0 0
    %275 = vmatmul.mubr.bf16.gmra.mxu0 %v155
    %v276 = vpop.f32.mrf.mxu0
    %v277 = vadd.f32 %v103, %v276
    %v278 = vpop.f32.mrf.mxu0
    %v279 = vpop.f32.mrf.mxu0
    %v280 = vadd.f32 %v103, %v279
    %v281 = vpop.f32.mrf.mxu0
    %282 = vmatprep.mubr.bf16.mxu0 0
    %283 = vmatmul.mubr.bf16.gmra.mxu0 %v158
    %v284 = vpop.f32.mrf.mxu0
    %v285 = vadd.f32 %v103, %v284
    %v286 = vpop.f32.mrf.mxu0
    %v287 = vpop.f32.mrf.mxu0
    %v288 = vadd.f32 %v103, %v287
    %v289 = vpop.f32.mrf.mxu0
    %290 = vmatprep.mubr.bf16.mxu0 0
    %291 = vmatmul.mubr.bf16.gmra.mxu0 %v161
    %v292 = vpop.f32.mrf.mxu0
    %v293 = vadd.f32 %v103, %v292
    %v294 = vpop.f32.mrf.mxu0
    %v295 = vpop.f32.mrf.mxu0
    %v296 = vadd.f32 %v103, %v295
    %v297 = vpop.f32.mrf.mxu0
    %298 = vmatprep.mubr.bf16.mxu0 0
    %299 = vmatmul.mubr.bf16.gmra.mxu0 %v164
    %v300 = vpop.f32.mrf.mxu0
    %v301 = vadd.f32 %v103, %v300
    %v302 = vpop.f32.mrf.mxu0
    %v303 = vpop.f32.mrf.mxu0
    %v304 = vadd.f32 %v103, %v303
    %v305 = vpop.f32.mrf.mxu0
    %306 = vmatprep.mubr.bf16.mxu0 0
    %307 = vmatmul.mubr.bf16.gmra.mxu0 %v167
    %v308 = vpop.f32.mrf.mxu0
    %v309 = vadd.f32 %v103, %v308
    %v310 = vpop.f32.mrf.mxu0
    %v311 = vpop.f32.mrf.mxu0
    %v312 = vadd.f32 %v103, %v311
    %v313 = vpop.f32.mrf.mxu0
    %314 = vmatprep.mubr.bf16.mxu0 0
    %315 = vmatmul.mubr.bf16.gmra.mxu0 %v170
    %v316 = vpop.f32.mrf.mxu0
    %v317 = vadd.f32 %v103, %v316
    %v318 = vpop.f32.mrf.mxu0
    %v319 = vpop.f32.mrf.mxu0
    %v320 = vadd.f32 %v103, %v319
    %v321 = vpop.f32.mrf.mxu0
    %322 = vmatprep.mubr.bf16.mxu0 0
    %323 = vmatmul.mubr.bf16.gmra.mxu0 %v173
    %v324 = vpop.f32.mrf.mxu0
    %v325 = vadd.f32 %v103, %v324
    %v326 = vpop.f32.mrf.mxu0
    %v327 = vpop.f32.mrf.mxu0
    %v328 = vadd.f32 %v103, %v327
    %v329 = vpop.f32.mrf.mxu0
    %330 = vmatprep.mubr.bf16.mxu0 0
    %331 = vmatmul.mubr.bf16.gmra.mxu0 %v176
    %v332 = vpop.f32.mrf.mxu0
    %v333 = vadd.f32 %v103, %v332
    %v334 = vpop.f32.mrf.mxu0
    %v335 = vpop.f32.mrf.mxu0
    %v336 = vadd.f32 %v103, %v335
    %v337 = vpop.f32.mrf.mxu0
    %338 = vdwg.mxu0
    %v339 = vmul.f32 %v213, 0.1
    %v340 = vmul.f32 %v216, 0.1
    %v341 = vmul.f32 %v221, 0.1
    %v342 = vmul.f32 %v224, 0.1
    %v343 = vmul.f32 %v229, 0.1
    %v344 = vmul.f32 %v232, 0.1
    %v345 = vmul.f32 %v237, 0.1
    %v346 = vmul.f32 %v240, 0.1
    %v347 = vmul.f32 %v245, 0.1
    %v348 = vmul.f32 %v248, 0.1
    %v349 = vmul.f32 %v253, 0.1
    %v350 = vmul.f32 %v256, 0.1
    %v351 = vmul.f32 %v261, 0.1
    %v352 = vmul.f32 %v264, 0.1
    %v353 = vmul.f32 %v269, 0.1
    %v354 = vmul.f32 %v272, 0.1
    %v355 = vmul.f32 %v277, 0.1
    %v356 = vmul.f32 %v280, 0.1
    %v357 = vmul.f32 %v285, 0.1
    %v358 = vmul.f32 %v288, 0.1
    %v359 = vmul.f32 %v293, 0.1
    %v360 = vmul.f32 %v296, 0.1
    %v361 = vmul.f32 %v301, 0.1
    %v362 = vmul.f32 %v304, 0.1
    %v363 = vmul.f32 %v309, 0.1
    %v364 = vmul.f32 %v312, 0.1
    %v365 = vmul.f32 %v317, 0.1
    %v366 = vmul.f32 %v320, 0.1
    %v367 = vmul.f32 %v325, 0.1
    %v368 = vmul.f32 %v328, 0.1
    %v369 = vmul.f32 %v333, 0.1
    %v370 = vmul.f32 %v336, 0.1
    %v371 = vmax.f32 %v213, %v339
    %v372 = vmax.f32 %v216, %v340
    %v373 = vmax.f32 %v221, %v341
    %v374 = vmax.f32 %v224, %v342
    %v375 = vmax.f32 %v229, %v343
    %v376 = vmax.f32 %v232, %v344
    %v377 = vmax.f32 %v237, %v345
    %v378 = vmax.f32 %v240, %v346
    %v379 = vmax.f32 %v245, %v347
    %v380 = vmax.f32 %v248, %v348
    %v381 = vmax.f32 %v253, %v349
    %v382 = vmax.f32 %v256, %v350
    %v383 = vmax.f32 %v261, %v351
    %v384 = vmax.f32 %v264, %v352
    %v385 = vmax.f32 %v269, %v353
    %v386 = vmax.f32 %v272, %v354
    %v387 = vmax.f32 %v277, %v355
    %v388 = vmax.f32 %v280, %v356
    %v389 = vmax.f32 %v285, %v357
    %v390 = vmax.f32 %v288, %v358
    %v391 = vmax.f32 %v293, %v359
    %v392 = vmax.f32 %v296, %v360
    %v393 = vmax.f32 %v301, %v361
    %v394 = vmax.f32 %v304, %v362
    %v395 = vmax.f32 %v309, %v363
    %v396 = vmax.f32 %v312, %v364
    %v397 = vmax.f32 %v317, %v365
    %v398 = vmax.f32 %v320, %v366
    %v399 = vmax.f32 %v325, %v367
    %v400 = vmax.f32 %v328, %v368
    %v401 = vmax.f32 %v333, %v369
    %v402 = vmax.f32 %v336, %v370
    %v403 = vpack.c.bf16 %v372, %v371
    %v404 = vpack.c.bf16 %v374, %v373
    %v405 = vpack.c.bf16 %v376, %v375
    %v406 = vpack.c.bf16 %v378, %v377
    %v407 = vpack.c.bf16 %v380, %v379
    %v408 = vpack.c.bf16 %v382, %v381
    %v409 = vpack.c.bf16 %v384, %v383
    %v410 = vpack.c.bf16 %v386, %v385
    %v411 = vpack.c.bf16 %v388, %v387
    %v412 = vpack.c.bf16 %v390, %v389
    %v413 = vpack.c.bf16 %v392, %v391
    %v414 = vpack.c.bf16 %v394, %v393
    %v415 = vpack.c.bf16 %v396, %v395
    %v416 = vpack.c.bf16 %v398, %v397
    %v417 = vpack.c.bf16 %v400, %v399
    %v418 = vpack.c.bf16 %v402, %v401
    %v419 = vld [vmem:[%s3] sm:$0xff]
    %v420 = vld [vmem:[%s3 + $0x8] sm:$0xff]
    %v421 = vld [vmem:[%s3 + $0x10] sm:$0xff]
    %v422 = vld [vmem:[%s3 + $0x18] sm:$0xff]
    %v423 = vld [vmem:[%s3 + $0x20] sm:$0xff]
    %v424 = vld [vmem:[%s3 + $0x28] sm:$0xff]
    %v425 = vld [vmem:[%s3 + $0x30] sm:$0xff]
    %v426 = vld [vmem:[%s3 + $0x38] sm:$0xff]
    %v427 = vld [vmem:[%s3 + $0x40] sm:$0xff]
    %v428 = vld [vmem:[%s3 + $0x48] sm:$0xff]
    %v429 = vld [vmem:[%s3 + $0x50] sm:$0xff]
    %v430 = vld [vmem:[%s3 + $0x58] sm:$0xff]
    %v431 = vld [vmem:[%s3 + $0x60] sm:$0xff]
    %v432 = vld [vmem:[%s3 + $0x68] sm:$0xff]
    %v433 = vld [vmem:[%s3 + $0x70] sm:$0xff]
    %v434 = vld [vmem:[%s3 + $0x78] sm:$0xff]
    %v435 = vld [vmem:[%s4] sm:$0x3]
    %v437 = vlaneseq
    %v438 = vshrl.u32 %v437, 7
    %v439 = vsub.s32 0, %v438
    %v440 = vrot.slane %v435, %v439
    %v441 = vlaneseq
    %v442 = vshrl.u32 %v441, 7
    %v443 = vsub.s32 1, %v442
    %v444 = vrot.slane %v435, %v443
    %v463 = vunpack.c.l.b16 %v419
    %v464 = vunpack.c.h.b16 %v419
    %v465 = vunpack.c.l.b16 %v420
    %v466 = vunpack.c.h.b16 %v420
    %v467 = vunpack.c.l.b16 %v421
    %v468 = vunpack.c.h.b16 %v421
    %v469 = vunpack.c.l.b16 %v422
    %v470 = vunpack.c.h.b16 %v422
    %v471 = vunpack.c.l.b16 %v423
    %v472 = vunpack.c.h.b16 %v423
    %v473 = vunpack.c.l.b16 %v424
    %v474 = vunpack.c.h.b16 %v424
    %v475 = vunpack.c.l.b16 %v425
    %v476 = vunpack.c.h.b16 %v425
    %v477 = vunpack.c.l.b16 %v426
    %v478 = vunpack.c.h.b16 %v426
    %v479 = vunpack.c.l.b16 %v427
    %v480 = vunpack.c.h.b16 %v427
    %v481 = vunpack.c.l.b16 %v428
    %v482 = vunpack.c.h.b16 %v428
    %v483 = vunpack.c.l.b16 %v429
    %v484 = vunpack.c.h.b16 %v429
    %v485 = vunpack.c.l.b16 %v430
    %v486 = vunpack.c.h.b16 %v430
    %v487 = vunpack.c.l.b16 %v431
    %v488 = vunpack.c.h.b16 %v431
    %v489 = vunpack.c.l.b16 %v432
    %v490 = vunpack.c.h.b16 %v432
    %v491 = vunpack.c.l.b16 %v433
    %v492 = vunpack.c.h.b16 %v433
    %v493 = vunpack.c.l.b16 %v434
    %v494 = vunpack.c.h.b16 %v434
    %v495 = vpack.c.b16 %v465, %v463
    %v496 = vpack.c.b16 %v466, %v464
    %v497 = vpack.c.b16 %v469, %v467
    %v498 = vpack.c.b16 %v470, %v468
    %v499 = vpack.c.b16 %v473, %v471
    %v500 = vpack.c.b16 %v474, %v472
    %v501 = vpack.c.b16 %v477, %v475
    %v502 = vpack.c.b16 %v478, %v476
    %v503 = vpack.c.b16 %v481, %v479
    %v504 = vpack.c.b16 %v482, %v480
    %v505 = vpack.c.b16 %v485, %v483
    %v506 = vpack.c.b16 %v486, %v484
    %v507 = vpack.c.b16 %v489, %v487
    %v508 = vpack.c.b16 %v490, %v488
    %v509 = vpack.c.b16 %v493, %v491
    %v510 = vpack.c.b16 %v494, %v492
    %527 = vmatprep.subr.bf16.mxu0 %v510
    %528 = vmatpush1.bf16.msra.mxu0 %v509
    %529 = vmatprep.subr.bf16.mxu0 %v508
    %530 = vmatpush1.bf16.msra.mxu0 %v507
    %531 = vmatprep.subr.bf16.mxu0 %v506
    %532 = vmatpush1.bf16.msra.mxu0 %v505
    %533 = vmatprep.subr.bf16.mxu0 %v504
    %534 = vmatpush1.bf16.msra.mxu0 %v503
    %535 = vmatprep.subr.bf16.mxu0 %v502
    %536 = vmatpush1.bf16.msra.mxu0 %v501
    %537 = vmatprep.subr.bf16.mxu0 %v500
    %538 = vmatpush1.bf16.msra.mxu0 %v499
    %539 = vmatprep.subr.bf16.mxu0 %v498
    %540 = vmatpush1.bf16.msra.mxu0 %v497
    %541 = vmatprep.subr.bf16.mxu0 %v496
    %542 = vmatpush1.bf16.msra.mxu0 %v495
    %543 = vmatprep.subr.bf16.mxu0 0
    %544 = vmatpush2.bf16.msra.mxu0 0
    %545 = vmatprep.subr.bf16.mxu0 0
    %546 = vmatpush2.bf16.msra.mxu0 0
    %547 = vmatprep.subr.bf16.mxu0 0
    %548 = vmatpush2.bf16.msra.mxu0 0
    %549 = vmatprep.subr.bf16.mxu0 0
    %550 = vmatpush2.bf16.msra.mxu0 0
    %551 = vmatprep.subr.bf16.mxu0 0
    %552 = vmatpush2.bf16.msra.mxu0 0
    %553 = vmatprep.subr.bf16.mxu0 0
    %554 = vmatpush2.bf16.msra.mxu0 0
    %555 = vmatprep.subr.bf16.mxu0 0
    %556 = vmatpush2.bf16.msra.mxu0 0
    %557 = vmatprep.subr.bf16.mxu0 0
    %558 = vmatpush2.bf16.msra.mxu0 0
    %559 = vmatprep.mubr.bf16.mxu0 0
    %560 = vmatmul.mubr.bf16.gmra.mxu0 %v403
    %v561 = vpop.f32.mrf.mxu0
    %v562 = vadd.f32 %v440, %v561
    %v563 = vpop.f32.mrf.mxu0
    %v564 = vadd.f32 %v444, %v563
    %v565 = vpop.f32.mrf.mxu0
    %v566 = vadd.f32 %v440, %v565
    %v567 = vpop.f32.mrf.mxu0
    %v568 = vadd.f32 %v444, %v567
    %569 = vmatprep.mubr.bf16.mxu0 0
    %570 = vmatmul.mubr.bf16.gmra.mxu0 %v404
    %v571 = vpop.f32.mrf.mxu0
    %v572 = vadd.f32 %v440, %v571
    %v573 = vpop.f32.mrf.mxu0
    %v574 = vadd.f32 %v444, %v573
    %v575 = vpop.f32.mrf.mxu0
    %v576 = vadd.f32 %v440, %v575
    %v577 = vpop.f32.mrf.mxu0
    %v578 = vadd.f32 %v444, %v577
    %579 = vmatprep.mubr.bf16.mxu0 0
    %580 = vmatmul.mubr.bf16.gmra.mxu0 %v405
    %v581 = vpop.f32.mrf.mxu0
    %v582 = vadd.f32 %v440, %v581
    %v583 = vpop.f32.mrf.mxu0
    %v584 = vadd.f32 %v444, %v583
    %v585 = vpop.f32.mrf.mxu0
    %v586 = vadd.f32 %v440, %v585
    %v587 = vpop.f32.mrf.mxu0
    %v588 = vadd.f32 %v444, %v587
    %589 = vmatprep.mubr.bf16.mxu0 0
    %590 = vmatmul.mubr.bf16.gmra.mxu0 %v406
    %v591 = vpop.f32.mrf.mxu0
    %v592 = vadd.f32 %v440, %v591
    %v593 = vpop.f32.mrf.mxu0
    %v594 = vadd.f32 %v444, %v593
    %v595 = vpop.f32.mrf.mxu0
    %v596 = vadd.f32 %v440, %v595
    %v597 = vpop.f32.mrf.mxu0
    %v598 = vadd.f32 %v444, %v597
    %599 = vmatprep.mubr.bf16.mxu0 0
    %600 = vmatmul.mubr.bf16.gmra.mxu0 %v407
    %v601 = vpop.f32.mrf.mxu0
    %v602 = vadd.f32 %v440, %v601
    %v603 = vpop.f32.mrf.mxu0
    %v604 = vadd.f32 %v444, %v603
    %v605 = vpop.f32.mrf.mxu0
    %v606 = vadd.f32 %v440, %v605
    %v607 = vpop.f32.mrf.mxu0
    %v608 = vadd.f32 %v444, %v607
    %609 = vmatprep.mubr.bf16.mxu0 0
    %610 = vmatmul.mubr.bf16.gmra.mxu0 %v408
    %v611 = vpop.f32.mrf.mxu0
    %v612 = vadd.f32 %v440, %v611
    %v613 = vpop.f32.mrf.mxu0
    %v614 = vadd.f32 %v444, %v613
    %v615 = vpop.f32.mrf.mxu0
    %v616 = vadd.f32 %v440, %v615
    %v617 = vpop.f32.mrf.mxu0
    %v618 = vadd.f32 %v444, %v617
    %619 = vmatprep.mubr.bf16.mxu0 0
    %620 = vmatmul.mubr.bf16.gmra.mxu0 %v409
    %v621 = vpop.f32.mrf.mxu0
    %v622 = vadd.f32 %v440, %v621
    %v623 = vpop.f32.mrf.mxu0
    %v624 = vadd.f32 %v444, %v623
    %v625 = vpop.f32.mrf.mxu0
    %v626 = vadd.f32 %v440, %v625
    %v627 = vpop.f32.mrf.mxu0
    %v628 = vadd.f32 %v444, %v627
    %629 = vmatprep.mubr.bf16.mxu0 0
    %630 = vmatmul.mubr.bf16.gmra.mxu0 %v410
    %v631 = vpop.f32.mrf.mxu0
    %v632 = vadd.f32 %v440, %v631
    %v633 = vpop.f32.mrf.mxu0
    %v634 = vadd.f32 %v444, %v633
    %v635 = vpop.f32.mrf.mxu0
    %v636 = vadd.f32 %v440, %v635
    %v637 = vpop.f32.mrf.mxu0
    %v638 = vadd.f32 %v444, %v637
    %639 = vmatprep.mubr.bf16.mxu0 0
    %640 = vmatmul.mubr.bf16.gmra.mxu0 %v411
    %v641 = vpop.f32.mrf.mxu0
    %v642 = vadd.f32 %v440, %v641
    %v643 = vpop.f32.mrf.mxu0
    %v644 = vadd.f32 %v444, %v643
    %v645 = vpop.f32.mrf.mxu0
    %v646 = vadd.f32 %v440, %v645
    %v647 = vpop.f32.mrf.mxu0
    %v648 = vadd.f32 %v444, %v647
    %649 = vmatprep.mubr.bf16.mxu0 0
    %650 = vmatmul.mubr.bf16.gmra.mxu0 %v412
    %v651 = vpop.f32.mrf.mxu0
    %v652 = vadd.f32 %v440, %v651
    %v653 = vpop.f32.mrf.mxu0
    %v654 = vadd.f32 %v444, %v653
    %v655 = vpop.f32.mrf.mxu0
    %v656 = vadd.f32 %v440, %v655
    %v657 = vpop.f32.mrf.mxu0
    %v658 = vadd.f32 %v444, %v657
    %659 = vmatprep.mubr.bf16.mxu0 0
    %660 = vmatmul.mubr.bf16.gmra.mxu0 %v413
    %v661 = vpop.f32.mrf.mxu0
    %v662 = vadd.f32 %v440, %v661
    %v663 = vpop.f32.mrf.mxu0
    %v664 = vadd.f32 %v444, %v663
    %v665 = vpop.f32.mrf.mxu0
    %v666 = vadd.f32 %v440, %v665
    %v667 = vpop.f32.mrf.mxu0
    %v668 = vadd.f32 %v444, %v667
    %669 = vmatprep.mubr.bf16.mxu0 0
    %670 = vmatmul.mubr.bf16.gmra.mxu0 %v414
    %v671 = vpop.f32.mrf.mxu0
    %v672 = vadd.f32 %v440, %v671
    %v673 = vpop.f32.mrf.mxu0
    %v674 = vadd.f32 %v444, %v673
    %v675 = vpop.f32.mrf.mxu0
    %v676 = vadd.f32 %v440, %v675
    %v677 = vpop.f32.mrf.mxu0
    %v678 = vadd.f32 %v444, %v677
    %679 = vmatprep.mubr.bf16.mxu0 0
    %680 = vmatmul.mubr.bf16.gmra.mxu0 %v415
    %v681 = vpop.f32.mrf.mxu0
    %v682 = vadd.f32 %v440, %v681
    %v683 = vpop.f32.mrf.mxu0
    %v684 = vadd.f32 %v444, %v683
    %v685 = vpop.f32.mrf.mxu0
    %v686 = vadd.f32 %v440, %v685
    %v687 = vpop.f32.mrf.mxu0
    %v688 = vadd.f32 %v444, %v687
    %689 = vmatprep.mubr.bf16.mxu0 0
    %690 = vmatmul.mubr.bf16.gmra.mxu0 %v416
    %v691 = vpop.f32.mrf.mxu0
    %v692 = vadd.f32 %v440, %v691
    %v693 = vpop.f32.mrf.mxu0
    %v694 = vadd.f32 %v444, %v693
    %v695 = vpop.f32.mrf.mxu0
    %v696 = vadd.f32 %v440, %v695
    %v697 = vpop.f32.mrf.mxu0
    %v698 = vadd.f32 %v444, %v697
    %699 = vmatprep.mubr.bf16.mxu0 0
    %700 = vmatmul.mubr.bf16.gmra.mxu0 %v417
    %v701 = vpop.f32.mrf.mxu0
    %v702 = vadd.f32 %v440, %v701
    %v703 = vpop.f32.mrf.mxu0
    %v704 = vadd.f32 %v444, %v703
    %v705 = vpop.f32.mrf.mxu0
    %v706 = vadd.f32 %v440, %v705
    %v707 = vpop.f32.mrf.mxu0
    %v708 = vadd.f32 %v444, %v707
    %709 = vmatprep.mubr.bf16.mxu0 0
    %710 = vmatmul.mubr.bf16.gmra.mxu0 %v418
    %v711 = vpop.f32.mrf.mxu0
    %v712 = vadd.f32 %v440, %v711
    %v713 = vpop.f32.mrf.mxu0
    %v714 = vadd.f32 %v444, %v713
    %v715 = vpop.f32.mrf.mxu0
    %v716 = vadd.f32 %v440, %v715
    %v717 = vpop.f32.mrf.mxu0
    %v718 = vadd.f32 %v444, %v717
    %719 = vdwg.mxu0
    %v720 = vmul.f32 %v562, 0.1
    %v721 = vmul.f32 %v564, 0.1
    %v722 = vmul.f32 %v566, 0.1
    %v723 = vmul.f32 %v568, 0.1
    %v724 = vmul.f32 %v572, 0.1
    %v725 = vmul.f32 %v574, 0.1
    %v726 = vmul.f32 %v576, 0.1
    %v727 = vmul.f32 %v578, 0.1
    %v728 = vmul.f32 %v582, 0.1
    %v729 = vmul.f32 %v584, 0.1
    %v730 = vmul.f32 %v586, 0.1
    %v731 = vmul.f32 %v588, 0.1
    %v732 = vmul.f32 %v592, 0.1
    %v733 = vmul.f32 %v594, 0.1
    %v734 = vmul.f32 %v596, 0.1
    %v735 = vmul.f32 %v598, 0.1
    %v736 = vmul.f32 %v602, 0.1
    %v737 = vmul.f32 %v604, 0.1
    %v738 = vmul.f32 %v606, 0.1
    %v739 = vmul.f32 %v608, 0.1
    %v740 = vmul.f32 %v612, 0.1
    %v741 = vmul.f32 %v614, 0.1
    %v742 = vmul.f32 %v616, 0.1
    %v743 = vmul.f32 %v618, 0.1
    %v744 = vmul.f32 %v622, 0.1
    %v745 = vmul.f32 %v624, 0.1
    %v746 = vmul.f32 %v626, 0.1
    %v747 = vmul.f32 %v628, 0.1
    %v748 = vmul.f32 %v632, 0.1
    %v749 = vmul.f32 %v634, 0.1
    %v750 = vmul.f32 %v636, 0.1
    %v751 = vmul.f32 %v638, 0.1
    %v752 = vmul.f32 %v642, 0.1
    %v753 = vmul.f32 %v644, 0.1
    %v754 = vmul.f32 %v646, 0.1
    %v755 = vmul.f32 %v648, 0.1
    %v756 = vmul.f32 %v652, 0.1
    %v757 = vmul.f32 %v654, 0.1
    %v758 = vmul.f32 %v656, 0.1
    %v759 = vmul.f32 %v658, 0.1
    %v760 = vmul.f32 %v662, 0.1
    %v761 = vmul.f32 %v664, 0.1
    %v762 = vmul.f32 %v666, 0.1
    %v763 = vmul.f32 %v668, 0.1
    %v764 = vmul.f32 %v672, 0.1
    %v765 = vmul.f32 %v674, 0.1
    %v766 = vmul.f32 %v676, 0.1
    %v767 = vmul.f32 %v678, 0.1
    %v768 = vmul.f32 %v682, 0.1
    %v769 = vmul.f32 %v684, 0.1
    %v770 = vmul.f32 %v686, 0.1
    %v771 = vmul.f32 %v688, 0.1
    %v772 = vmul.f32 %v692, 0.1
    %v773 = vmul.f32 %v694, 0.1
    %v774 = vmul.f32 %v696, 0.1
    %v775 = vmul.f32 %v698, 0.1
    %v776 = vmul.f32 %v702, 0.1
    %v777 = vmul.f32 %v704, 0.1
    %v778 = vmul.f32 %v706, 0.1
    %v779 = vmul.f32 %v708, 0.1
    %v780 = vmul.f32 %v712, 0.1
    %v781 = vmul.f32 %v714, 0.1
    %v782 = vmul.f32 %v716, 0.1
    %v783 = vmul.f32 %v718, 0.1
    %v784 = vmax.f32 %v562, %v720
    %v785 = vmax.f32 %v564, %v721
    %v786 = vmax.f32 %v566, %v722
    %v787 = vmax.f32 %v568, %v723
    %v788 = vmax.f32 %v572, %v724
    %v789 = vmax.f32 %v574, %v725
    %v790 = vmax.f32 %v576, %v726
    %v791 = vmax.f32 %v578, %v727
    %v792 = vmax.f32 %v582, %v728
    %v793 = vmax.f32 %v584, %v729
    %v794 = vmax.f32 %v586, %v730
    %v795 = vmax.f32 %v588, %v731
    %v796 = vmax.f32 %v592, %v732
    %v797 = vmax.f32 %v594, %v733
    %v798 = vmax.f32 %v596, %v734
    %v799 = vmax.f32 %v598, %v735
    %v800 = vmax.f32 %v602, %v736
    %v801 = vmax.f32 %v604, %v737
    %v802 = vmax.f32 %v606, %v738
    %v803 = vmax.f32 %v608, %v739
    %v804 = vmax.f32 %v612, %v740
    %v805 = vmax.f32 %v614, %v741
    %v806 = vmax.f32 %v616, %v742
    %v807 = vmax.f32 %v618, %v743
    %v808 = vmax.f32 %v622, %v744
    %v809 = vmax.f32 %v624, %v745
    %v810 = vmax.f32 %v626, %v746
    %v811 = vmax.f32 %v628, %v747
    %v812 = vmax.f32 %v632, %v748
    %v813 = vmax.f32 %v634, %v749
    %v814 = vmax.f32 %v636, %v750
    %v815 = vmax.f32 %v638, %v751
    %v816 = vmax.f32 %v642, %v752
    %v817 = vmax.f32 %v644, %v753
    %v818 = vmax.f32 %v646, %v754
    %v819 = vmax.f32 %v648, %v755
    %v820 = vmax.f32 %v652, %v756
    %v821 = vmax.f32 %v654, %v757
    %v822 = vmax.f32 %v656, %v758
    %v823 = vmax.f32 %v658, %v759
    %v824 = vmax.f32 %v662, %v760
    %v825 = vmax.f32 %v664, %v761
    %v826 = vmax.f32 %v666, %v762
    %v827 = vmax.f32 %v668, %v763
    %v828 = vmax.f32 %v672, %v764
    %v829 = vmax.f32 %v674, %v765
    %v830 = vmax.f32 %v676, %v766
    %v831 = vmax.f32 %v678, %v767
    %v832 = vmax.f32 %v682, %v768
    %v833 = vmax.f32 %v684, %v769
    %v834 = vmax.f32 %v686, %v770
    %v835 = vmax.f32 %v688, %v771
    %v836 = vmax.f32 %v692, %v772
    %v837 = vmax.f32 %v694, %v773
    %v838 = vmax.f32 %v696, %v774
    %v839 = vmax.f32 %v698, %v775
    %v840 = vmax.f32 %v702, %v776
    %v841 = vmax.f32 %v704, %v777
    %v842 = vmax.f32 %v706, %v778
    %v843 = vmax.f32 %v708, %v779
    %v844 = vmax.f32 %v712, %v780
    %v845 = vmax.f32 %v714, %v781
    %v846 = vmax.f32 %v716, %v782
    %v847 = vmax.f32 %v718, %v783
    %v848 = vpack.c.bf16 %v786, %v784
    %v849 = vpack.c.bf16 %v787, %v785
    %v850 = vpack.c.bf16 %v790, %v788
    %v851 = vpack.c.bf16 %v791, %v789
    %v852 = vpack.c.bf16 %v794, %v792
    %v853 = vpack.c.bf16 %v795, %v793
    %v854 = vpack.c.bf16 %v798, %v796
    %v855 = vpack.c.bf16 %v799, %v797
    %v856 = vpack.c.bf16 %v802, %v800
    %v857 = vpack.c.bf16 %v803, %v801
    %v858 = vpack.c.bf16 %v806, %v804
    %v859 = vpack.c.bf16 %v807, %v805
    %v860 = vpack.c.bf16 %v810, %v808
    %v861 = vpack.c.bf16 %v811, %v809
    %v862 = vpack.c.bf16 %v814, %v812
    %v863 = vpack.c.bf16 %v815, %v813
    %v864 = vpack.c.bf16 %v818, %v816
    %v865 = vpack.c.bf16 %v819, %v817
    %v866 = vpack.c.bf16 %v822, %v820
    %v867 = vpack.c.bf16 %v823, %v821
    %v868 = vpack.c.bf16 %v826, %v824
    %v869 = vpack.c.bf16 %v827, %v825
    %v870 = vpack.c.bf16 %v830, %v828
    %v871 = vpack.c.bf16 %v831, %v829
    %v872 = vpack.c.bf16 %v834, %v832
    %v873 = vpack.c.bf16 %v835, %v833
    %v874 = vpack.c.bf16 %v838, %v836
    %v875 = vpack.c.bf16 %v839, %v837
    %v876 = vpack.c.bf16 %v842, %v840
    %v877 = vpack.c.bf16 %v843, %v841
    %v878 = vpack.c.bf16 %v846, %v844
    %v879 = vpack.c.bf16 %v847, %v845
    %v880 = vld [vmem:[%s5] sm:$0xff]
    %v881 = vld [vmem:[%s5 + $0x8] sm:$0xff]
    %v882 = vld [vmem:[%s5 + $0x10] sm:$0xff]
    %v883 = vld [vmem:[%s5 + $0x18] sm:$0xff]
    %v884 = vld [vmem:[%s5 + $0x20] sm:$0xff]
    %v885 = vld [vmem:[%s5 + $0x28] sm:$0xff]
    %v886 = vld [vmem:[%s5 + $0x30] sm:$0xff]
    %v887 = vld [vmem:[%s5 + $0x38] sm:$0xff]
    %v888 = vld [vmem:[%s5 + $0x40] sm:$0xff]
    %v889 = vld [vmem:[%s5 + $0x48] sm:$0xff]
    %v890 = vld [vmem:[%s5 + $0x50] sm:$0xff]
    %v891 = vld [vmem:[%s5 + $0x58] sm:$0xff]
    %v892 = vld [vmem:[%s5 + $0x60] sm:$0xff]
    %v893 = vld [vmem:[%s5 + $0x68] sm:$0xff]
    %v894 = vld [vmem:[%s5 + $0x70] sm:$0xff]
    %v895 = vld [vmem:[%s5 + $0x78] sm:$0xff]
    %v896 = vld [vmem:[%s5 + $0x80] sm:$0xff]
    %v897 = vld [vmem:[%s5 + $0x88] sm:$0xff]
    %v898 = vld [vmem:[%s5 + $0x90] sm:$0xff]
    %v899 = vld [vmem:[%s5 + $0x98] sm:$0xff]
    %v900 = vld [vmem:[%s5 + $0xa0] sm:$0xff]
    %v901 = vld [vmem:[%s5 + $0xa8] sm:$0xff]
    %v902 = vld [vmem:[%s5 + $0xb0] sm:$0xff]
    %v903 = vld [vmem:[%s5 + $0xb8] sm:$0xff]
    %v904 = vld [vmem:[%s5 + $0xc0] sm:$0xff]
    %v905 = vld [vmem:[%s5 + $0xc8] sm:$0xff]
    %v906 = vld [vmem:[%s5 + $0xd0] sm:$0xff]
    %v907 = vld [vmem:[%s5 + $0xd8] sm:$0xff]
    %v908 = vld [vmem:[%s5 + $0xe0] sm:$0xff]
    %v909 = vld [vmem:[%s5 + $0xe8] sm:$0xff]
    %v910 = vld [vmem:[%s5 + $0xf0] sm:$0xff]
    %v911 = vld [vmem:[%s5 + $0xf8] sm:$0xff]
    %v912 = vld [vmem:[%s6] sm:$0x3]
    %v914 = vlaneseq
    %v915 = vshrl.u32 %v914, 7
    %v916 = vsub.s32 0, %v915
    %v917 = vrot.slane %v912, %v916
    %v918 = vlaneseq
    %v919 = vshrl.u32 %v918, 7
    %v920 = vsub.s32 1, %v919
    %v921 = vrot.slane %v912, %v920
    %v956 = vunpack.c.l.b16 %v880
    %v957 = vunpack.c.h.b16 %v880
    %v958 = vunpack.c.l.b16 %v881
    %v959 = vunpack.c.h.b16 %v881
    %v960 = vunpack.c.l.b16 %v882
    %v961 = vunpack.c.h.b16 %v882
    %v962 = vunpack.c.l.b16 %v883
    %v963 = vunpack.c.h.b16 %v883
    %v964 = vunpack.c.l.b16 %v884
    %v965 = vunpack.c.h.b16 %v884
    %v966 = vunpack.c.l.b16 %v885
    %v967 = vunpack.c.h.b16 %v885
    %v968 = vunpack.c.l.b16 %v886
    %v969 = vunpack.c.h.b16 %v886
    %v970 = vunpack.c.l.b16 %v887
    %v971 = vunpack.c.h.b16 %v887
    %v972 = vunpack.c.l.b16 %v888
    %v973 = vunpack.c.h.b16 %v888
    %v974 = vunpack.c.l.b16 %v889
    %v975 = vunpack.c.h.b16 %v889
    %v976 = vunpack.c.l.b16 %v890
    %v977 = vunpack.c.h.b16 %v890
    %v978 = vunpack.c.l.b16 %v891
    %v979 = vunpack.c.h.b16 %v891
    %v980 = vunpack.c.l.b16 %v892
    %v981 = vunpack.c.h.b16 %v892
    %v982 = vunpack.c.l.b16 %v893
    %v983 = vunpack.c.h.b16 %v893
    %v984 = vunpack.c.l.b16 %v894
    %v985 = vunpack.c.h.b16 %v894
    %v986 = vunpack.c.l.b16 %v895
    %v987 = vunpack.c.h.b16 %v895
    %v988 = vunpack.c.l.b16 %v896
    %v989 = vunpack.c.h.b16 %v896
    %v990 = vunpack.c.l.b16 %v897
    %v991 = vunpack.c.h.b16 %v897
    %v992 = vunpack.c.l.b16 %v898
    %v993 = vunpack.c.h.b16 %v898
    %v994 = vunpack.c.l.b16 %v899
    %v995 = vunpack.c.h.b16 %v899
    %v996 = vunpack.c.l.b16 %v900
    %v997 = vunpack.c.h.b16 %v900
    %v998 = vunpack.c.l.b16 %v901
    %v999 = vunpack.c.h.b16 %v901
    %v1000 = vunpack.c.l.b16 %v902
    %v1001 = vunpack.c.h.b16 %v902
    %v1002 = vunpack.c.l.b16 %v903
    %v1003 = vunpack.c.h.b16 %v903
    %v1004 = vunpack.c.l.b16 %v904
    %v1005 = vunpack.c.h.b16 %v904
    %v1006 = vunpack.c.l.b16 %v905
    %v1007 = vunpack.c.h.b16 %v905
    %v1008 = vunpack.c.l.b16 %v906
    %v1009 = vunpack.c.h.b16 %v906
    %v1010 = vunpack.c.l.b16 %v907
    %v1011 = vunpack.c.h.b16 %v907
    %v1012 = vunpack.c.l.b16 %v908
    %v1013 = vunpack.c.h.b16 %v908
    %v1014 = vunpack.c.l.b16 %v909
    %v1015 = vunpack.c.h.b16 %v909
    %v1016 = vunpack.c.l.b16 %v910
    %v1017 = vunpack.c.h.b16 %v910
    %v1018 = vunpack.c.l.b16 %v911
    %v1019 = vunpack.c.h.b16 %v911
    %v1020 = vpack.c.b16 %v958, %v956
    %v1021 = vpack.c.b16 %v959, %v957
    %v1022 = vpack.c.b16 %v962, %v960
    %v1023 = vpack.c.b16 %v963, %v961
    %v1024 = vpack.c.b16 %v966, %v964
    %v1025 = vpack.c.b16 %v967, %v965
    %v1026 = vpack.c.b16 %v970, %v968
    %v1027 = vpack.c.b16 %v971, %v969
    %v1028 = vpack.c.b16 %v974, %v972
    %v1029 = vpack.c.b16 %v975, %v973
    %v1030 = vpack.c.b16 %v978, %v976
    %v1031 = vpack.c.b16 %v979, %v977
    %v1032 = vpack.c.b16 %v982, %v980
    %v1033 = vpack.c.b16 %v983, %v981
    %v1034 = vpack.c.b16 %v986, %v984
    %v1035 = vpack.c.b16 %v987, %v985
    %v1036 = vpack.c.b16 %v990, %v988
    %v1037 = vpack.c.b16 %v991, %v989
    %v1038 = vpack.c.b16 %v994, %v992
    %v1039 = vpack.c.b16 %v995, %v993
    %v1040 = vpack.c.b16 %v998, %v996
    %v1041 = vpack.c.b16 %v999, %v997
    %v1042 = vpack.c.b16 %v1002, %v1000
    %v1043 = vpack.c.b16 %v1003, %v1001
    %v1044 = vpack.c.b16 %v1006, %v1004
    %v1045 = vpack.c.b16 %v1007, %v1005
    %v1046 = vpack.c.b16 %v1010, %v1008
    %v1047 = vpack.c.b16 %v1011, %v1009
    %v1048 = vpack.c.b16 %v1014, %v1012
    %v1049 = vpack.c.b16 %v1015, %v1013
    %v1050 = vpack.c.b16 %v1018, %v1016
    %v1051 = vpack.c.b16 %v1019, %v1017
    %1084 = vmatprep.subr.bf16.mxu0 %v1035
    %1085 = vmatpush1.bf16.msra.mxu0 %v1034
    %1086 = vmatprep.subr.bf16.mxu0 %v1033
    %1087 = vmatpush1.bf16.msra.mxu0 %v1032
    %1088 = vmatprep.subr.bf16.mxu0 %v1031
    %1089 = vmatpush1.bf16.msra.mxu0 %v1030
    %1090 = vmatprep.subr.bf16.mxu0 %v1029
    %1091 = vmatpush1.bf16.msra.mxu0 %v1028
    %1092 = vmatprep.subr.bf16.mxu0 %v1027
    %1093 = vmatpush1.bf16.msra.mxu0 %v1026
    %1094 = vmatprep.subr.bf16.mxu0 %v1025
    %1095 = vmatpush1.bf16.msra.mxu0 %v1024
    %1096 = vmatprep.subr.bf16.mxu0 %v1023
    %1097 = vmatpush1.bf16.msra.mxu0 %v1022
    %1098 = vmatprep.subr.bf16.mxu0 %v1021
    %1099 = vmatpush1.bf16.msra.mxu0 %v1020
    %1100 = vmatprep.subr.bf16.mxu0 %v1051
    %1101 = vmatpush2.bf16.msra.mxu0 %v1050
    %1102 = vmatprep.subr.bf16.mxu0 %v1049
    %1103 = vmatpush2.bf16.msra.mxu0 %v1048
    %1104 = vmatprep.subr.bf16.mxu0 %v1047
    %1105 = vmatpush2.bf16.msra.mxu0 %v1046
    %1106 = vmatprep.subr.bf16.mxu0 %v1045
    %1107 = vmatpush2.bf16.msra.mxu0 %v1044
    %1108 = vmatprep.subr.bf16.mxu0 %v1043
    %1109 = vmatpush2.bf16.msra.mxu0 %v1042
    %1110 = vmatprep.subr.bf16.mxu0 %v1041
    %1111 = vmatpush2.bf16.msra.mxu0 %v1040
    %1112 = vmatprep.subr.bf16.mxu0 %v1039
    %1113 = vmatpush2.bf16.msra.mxu0 %v1038
    %1114 = vmatprep.subr.bf16.mxu0 %v1037
    %1115 = vmatpush2.bf16.msra.mxu0 %v1036
    %1116 = vmatprep.mubr.bf16.mxu0 %v849
    %1117 = vmatmul.mubr.bf16.gmra.mxu0 %v848
    %v1118 = vpop.f32.mrf.mxu0
    %v1119 = vadd.f32 %v917, %v1118
    %v1120 = vpop.f32.mrf.mxu0
    %v1121 = vadd.f32 %v921, %v1120
    %v1122 = vpop.f32.mrf.mxu0
    %v1123 = vadd.f32 %v917, %v1122
    %v1124 = vpop.f32.mrf.mxu0
    %v1125 = vadd.f32 %v921, %v1124
    %1126 = vmatprep.mubr.bf16.mxu0 %v851
    %1127 = vmatmul.mubr.bf16.gmra.mxu0 %v850
    %v1128 = vpop.f32.mrf.mxu0
    %v1129 = vadd.f32 %v917, %v1128
    %v1130 = vpop.f32.mrf.mxu0
    %v1131 = vadd.f32 %v921, %v1130
    %v1132 = vpop.f32.mrf.mxu0
    %v1133 = vadd.f32 %v917, %v1132
    %v1134 = vpop.f32.mrf.mxu0
    %v1135 = vadd.f32 %v921, %v1134
    %1136 = vmatprep.mubr.bf16.mxu0 %v853
    %1137 = vmatmul.mubr.bf16.gmra.mxu0 %v852
    %v1138 = vpop.f32.mrf.mxu0
    %v1139 = vadd.f32 %v917, %v1138
    %v1140 = vpop.f32.mrf.mxu0
    %v1141 = vadd.f32 %v921, %v1140
    %v1142 = vpop.f32.mrf.mxu0
    %v1143 = vadd.f32 %v917, %v1142
    %v1144 = vpop.f32.mrf.mxu0
    %v1145 = vadd.f32 %v921, %v1144
    %1146 = vmatprep.mubr.bf16.mxu0 %v855
    %1147 = vmatmul.mubr.bf16.gmra.mxu0 %v854
    %v1148 = vpop.f32.mrf.mxu0
    %v1149 = vadd.f32 %v917, %v1148
    %v1150 = vpop.f32.mrf.mxu0
    %v1151 = vadd.f32 %v921, %v1150
    %v1152 = vpop.f32.mrf.mxu0
    %v1153 = vadd.f32 %v917, %v1152
    %v1154 = vpop.f32.mrf.mxu0
    %v1155 = vadd.f32 %v921, %v1154
    %1156 = vmatprep.mubr.bf16.mxu0 %v857
    %1157 = vmatmul.mubr.bf16.gmra.mxu0 %v856
    %v1158 = vpop.f32.mrf.mxu0
    %v1159 = vadd.f32 %v917, %v1158
    %v1160 = vpop.f32.mrf.mxu0
    %v1161 = vadd.f32 %v921, %v1160
    %v1162 = vpop.f32.mrf.mxu0
    %v1163 = vadd.f32 %v917, %v1162
    %v1164 = vpop.f32.mrf.mxu0
    %v1165 = vadd.f32 %v921, %v1164
    %1166 = vmatprep.mubr.bf16.mxu0 %v859
    %1167 = vmatmul.mubr.bf16.gmra.mxu0 %v858
    %v1168 = vpop.f32.mrf.mxu0
    %v1169 = vadd.f32 %v917, %v1168
    %v1170 = vpop.f32.mrf.mxu0
    %v1171 = vadd.f32 %v921, %v1170
    %v1172 = vpop.f32.mrf.mxu0
    %v1173 = vadd.f32 %v917, %v1172
    %v1174 = vpop.f32.mrf.mxu0
    %v1175 = vadd.f32 %v921, %v1174
    %1176 = vmatprep.mubr.bf16.mxu0 %v861
    %1177 = vmatmul.mubr.bf16.gmra.mxu0 %v860
    %v1178 = vpop.f32.mrf.mxu0
    %v1179 = vadd.f32 %v917, %v1178
    %v1180 = vpop.f32.mrf.mxu0
    %v1181 = vadd.f32 %v921, %v1180
    %v1182 = vpop.f32.mrf.mxu0
    %v1183 = vadd.f32 %v917, %v1182
    %v1184 = vpop.f32.mrf.mxu0
    %v1185 = vadd.f32 %v921, %v1184
    %1186 = vmatprep.mubr.bf16.mxu0 %v863
    %1187 = vmatmul.mubr.bf16.gmra.mxu0 %v862
    %v1188 = vpop.f32.mrf.mxu0
    %v1189 = vadd.f32 %v917, %v1188
    %v1190 = vpop.f32.mrf.mxu0
    %v1191 = vadd.f32 %v921, %v1190
    %v1192 = vpop.f32.mrf.mxu0
    %v1193 = vadd.f32 %v917, %v1192
    %v1194 = vpop.f32.mrf.mxu0
    %v1195 = vadd.f32 %v921, %v1194
    %1196 = vmatprep.mubr.bf16.mxu0 %v865
    %1197 = vmatmul.mubr.bf16.gmra.mxu0 %v864
    %v1198 = vpop.f32.mrf.mxu0
    %v1199 = vadd.f32 %v917, %v1198
    %v1200 = vpop.f32.mrf.mxu0
    %v1201 = vadd.f32 %v921, %v1200
    %v1202 = vpop.f32.mrf.mxu0
    %v1203 = vadd.f32 %v917, %v1202
    %v1204 = vpop.f32.mrf.mxu0
    %v1205 = vadd.f32 %v921, %v1204
    %1206 = vmatprep.mubr.bf16.mxu0 %v867
    %1207 = vmatmul.mubr.bf16.gmra.mxu0 %v866
    %v1208 = vpop.f32.mrf.mxu0
    %v1209 = vadd.f32 %v917, %v1208
    %v1210 = vpop.f32.mrf.mxu0
    %v1211 = vadd.f32 %v921, %v1210
    %v1212 = vpop.f32.mrf.mxu0
    %v1213 = vadd.f32 %v917, %v1212
    %v1214 = vpop.f32.mrf.mxu0
    %v1215 = vadd.f32 %v921, %v1214
    %1216 = vmatprep.mubr.bf16.mxu0 %v869
    %1217 = vmatmul.mubr.bf16.gmra.mxu0 %v868
    %v1218 = vpop.f32.mrf.mxu0
    %v1219 = vadd.f32 %v917, %v1218
    %v1220 = vpop.f32.mrf.mxu0
    %v1221 = vadd.f32 %v921, %v1220
    %v1222 = vpop.f32.mrf.mxu0
    %v1223 = vadd.f32 %v917, %v1222
    %v1224 = vpop.f32.mrf.mxu0
    %v1225 = vadd.f32 %v921, %v1224
    %1226 = vmatprep.mubr.bf16.mxu0 %v871
    %1227 = vmatmul.mubr.bf16.gmra.mxu0 %v870
    %v1228 = vpop.f32.mrf.mxu0
    %v1229 = vadd.f32 %v917, %v1228
    %v1230 = vpop.f32.mrf.mxu0
    %v1231 = vadd.f32 %v921, %v1230
    %v1232 = vpop.f32.mrf.mxu0
    %v1233 = vadd.f32 %v917, %v1232
    %v1234 = vpop.f32.mrf.mxu0
    %v1235 = vadd.f32 %v921, %v1234
    %1236 = vmatprep.mubr.bf16.mxu0 %v873
    %1237 = vmatmul.mubr.bf16.gmra.mxu0 %v872
    %v1238 = vpop.f32.mrf.mxu0
    %v1239 = vadd.f32 %v917, %v1238
    %v1240 = vpop.f32.mrf.mxu0
    %v1241 = vadd.f32 %v921, %v1240
    %v1242 = vpop.f32.mrf.mxu0
    %v1243 = vadd.f32 %v917, %v1242
    %v1244 = vpop.f32.mrf.mxu0
    %v1245 = vadd.f32 %v921, %v1244
    %1246 = vmatprep.mubr.bf16.mxu0 %v875
    %1247 = vmatmul.mubr.bf16.gmra.mxu0 %v874
    %v1248 = vpop.f32.mrf.mxu0
    %v1249 = vadd.f32 %v917, %v1248
    %v1250 = vpop.f32.mrf.mxu0
    %v1251 = vadd.f32 %v921, %v1250
    %v1252 = vpop.f32.mrf.mxu0
    %v1253 = vadd.f32 %v917, %v1252
    %v1254 = vpop.f32.mrf.mxu0
    %v1255 = vadd.f32 %v921, %v1254
    %1256 = vmatprep.mubr.bf16.mxu0 %v877
    %1257 = vmatmul.mubr.bf16.gmra.mxu0 %v876
    %v1258 = vpop.f32.mrf.mxu0
    %v1259 = vadd.f32 %v917, %v1258
    %v1260 = vpop.f32.mrf.mxu0
    %v1261 = vadd.f32 %v921, %v1260
    %v1262 = vpop.f32.mrf.mxu0
    %v1263 = vadd.f32 %v917, %v1262
    %v1264 = vpop.f32.mrf.mxu0
    %v1265 = vadd.f32 %v921, %v1264
    %1266 = vmatprep.mubr.bf16.mxu0 %v879
    %1267 = vmatmul.mubr.bf16.gmra.mxu0 %v878
    %v1268 = vpop.f32.mrf.mxu0
    %v1269 = vadd.f32 %v917, %v1268
    %v1270 = vpop.f32.mrf.mxu0
    %v1271 = vadd.f32 %v921, %v1270
    %v1272 = vpop.f32.mrf.mxu0
    %v1273 = vadd.f32 %v917, %v1272
    %v1274 = vpop.f32.mrf.mxu0
    %v1275 = vadd.f32 %v921, %v1274
    %1276 = vdwg.mxu0
    %v1277 = vtanh.pop %v1119
    %v1278 = vtanh.pop %v1121
    %v1279 = vtanh.pop %v1123
    %v1280 = vtanh.pop %v1125
    %v1281 = vtanh.pop %v1129
    %v1282 = vtanh.pop %v1131
    %v1283 = vtanh.pop %v1133
    %v1284 = vtanh.pop %v1135
    %v1285 = vtanh.pop %v1139
    %v1286 = vtanh.pop %v1141
    %v1287 = vtanh.pop %v1143
    %v1288 = vtanh.pop %v1145
    %v1289 = vtanh.pop %v1149
    %v1290 = vtanh.pop %v1151
    %v1291 = vtanh.pop %v1153
    %v1292 = vtanh.pop %v1155
    %v1293 = vtanh.pop %v1159
    %v1294 = vtanh.pop %v1161
    %v1295 = vtanh.pop %v1163
    %v1296 = vtanh.pop %v1165
    %v1297 = vtanh.pop %v1169
    %v1298 = vtanh.pop %v1171
    %v1299 = vtanh.pop %v1173
    %v1300 = vtanh.pop %v1175
    %v1301 = vtanh.pop %v1179
    %v1302 = vtanh.pop %v1181
    %v1303 = vtanh.pop %v1183
    %v1304 = vtanh.pop %v1185
    %v1305 = vtanh.pop %v1189
    %v1306 = vtanh.pop %v1191
    %v1307 = vtanh.pop %v1193
    %v1308 = vtanh.pop %v1195
    %v1309 = vtanh.pop %v1199
    %v1310 = vtanh.pop %v1201
    %v1311 = vtanh.pop %v1203
    %v1312 = vtanh.pop %v1205
    %v1313 = vtanh.pop %v1209
    %v1314 = vtanh.pop %v1211
    %v1315 = vtanh.pop %v1213
    %v1316 = vtanh.pop %v1215
    %v1317 = vtanh.pop %v1219
    %v1318 = vtanh.pop %v1221
    %v1319 = vtanh.pop %v1223
    %v1320 = vtanh.pop %v1225
    %v1321 = vtanh.pop %v1229
    %v1322 = vtanh.pop %v1231
    %v1323 = vtanh.pop %v1233
    %v1324 = vtanh.pop %v1235
    %v1325 = vtanh.pop %v1239
    %v1326 = vtanh.pop %v1241
    %v1327 = vtanh.pop %v1243
    %v1328 = vtanh.pop %v1245
    %v1329 = vtanh.pop %v1249
    %v1330 = vtanh.pop %v1251
    %v1331 = vtanh.pop %v1253
    %v1332 = vtanh.pop %v1255
    %v1333 = vtanh.pop %v1259
    %v1334 = vtanh.pop %v1261
    %v1335 = vtanh.pop %v1263
    %v1336 = vtanh.pop %v1265
    %v1337 = vtanh.pop %v1269
    %v1338 = vtanh.pop %v1271
    %v1339 = vtanh.pop %v1273
    %v1340 = vtanh.pop %v1275
    %1341 = vst [vmem:[#allocation5] sm:$0xff] %v1277
    %1342 = vst [vmem:[#allocation5 + $0x8] sm:$0xff] %v1278
    %1343 = vst [vmem:[#allocation5 + $0x10] sm:$0xff] %v1279
    %1344 = vst [vmem:[#allocation5 + $0x18] sm:$0xff] %v1280
    %1345 = vst [vmem:[#allocation5 + $0x20] sm:$0xff] %v1281
    %1346 = vst [vmem:[#allocation5 + $0x28] sm:$0xff] %v1282
    %1347 = vst [vmem:[#allocation5 + $0x30] sm:$0xff] %v1283
    %1348 = vst [vmem:[#allocation5 + $0x38] sm:$0xff] %v1284
    %1349 = vst [vmem:[#allocation5 + $0x40] sm:$0xff] %v1285
    %1350 = vst [vmem:[#allocation5 + $0x48] sm:$0xff] %v1286
    %1351 = vst [vmem:[#allocation5 + $0x50] sm:$0xff] %v1287
    %1352 = vst [vmem:[#allocation5 + $0x58] sm:$0xff] %v1288
    %1353 = vst [vmem:[#allocation5 + $0x60] sm:$0xff] %v1289
    %1354 = vst [vmem:[#allocation5 + $0x68] sm:$0xff] %v1290
    %1355 = vst [vmem:[#allocation5 + $0x70] sm:$0xff] %v1291
    %1356 = vst [vmem:[#allocation5 + $0x78] sm:$0xff] %v1292
    %1357 = vst [vmem:[#allocation5 + $0x80] sm:$0xff] %v1293
    %1358 = vst [vmem:[#allocation5 + $0x88] sm:$0xff] %v1294
    %1359 = vst [vmem:[#allocation5 + $0x90] sm:$0xff] %v1295
    %1360 = vst [vmem:[#allocation5 + $0x98] sm:$0xff] %v1296
    %1361 = vst [vmem:[#allocation5 + $0xa0] sm:$0xff] %v1297
    %1362 = vst [vmem:[#allocation5 + $0xa8] sm:$0xff] %v1298
    %1363 = vst [vmem:[#allocation5 + $0xb0] sm:$0xff] %v1299
    %1364 = vst [vmem:[#allocation5 + $0xb8] sm:$0xff] %v1300
    %1365 = vst [vmem:[#allocation5 + $0xc0] sm:$0xff] %v1301
    %1366 = vst [vmem:[#allocation5 + $0xc8] sm:$0xff] %v1302
    %1367 = vst [vmem:[#allocation5 + $0xd0] sm:$0xff] %v1303
    %1368 = vst [vmem:[#allocation5 + $0xd8] sm:$0xff] %v1304
    %1369 = vst [vmem:[#allocation5 + $0xe0] sm:$0xff] %v1305
    %1370 = vst [vmem:[#allocation5 + $0xe8] sm:$0xff] %v1306
    %1371 = vst [vmem:[#allocation5 + $0xf0] sm:$0xff] %v1307
    %1372 = vst [vmem:[#allocation5 + $0xf8] sm:$0xff] %v1308
    %1373 = vst [vmem:[#allocation5 + $0x100] sm:$0xff] %v1309
    %1374 = vst [vmem:[#allocation5 + $0x108] sm:$0xff] %v1310
    %1375 = vst [vmem:[#allocation5 + $0x110] sm:$0xff] %v1311
    %1376 = vst [vmem:[#allocation5 + $0x118] sm:$0xff] %v1312
    %1377 = vst [vmem:[#allocation5 + $0x120] sm:$0xff] %v1313
    %1378 = vst [vmem:[#allocation5 + $0x128] sm:$0xff] %v1314
    %1379 = vst [vmem:[#allocation5 + $0x130] sm:$0xff] %v1315
    %1380 = vst [vmem:[#allocation5 + $0x138] sm:$0xff] %v1316
    %1381 = vst [vmem:[#allocation5 + $0x140] sm:$0xff] %v1317
    %1382 = vst [vmem:[#allocation5 + $0x148] sm:$0xff] %v1318
    %1383 = vst [vmem:[#allocation5 + $0x150] sm:$0xff] %v1319
    %1384 = vst [vmem:[#allocation5 + $0x158] sm:$0xff] %v1320
    %1385 = vst [vmem:[#allocation5 + $0x160] sm:$0xff] %v1321
    %1386 = vst [vmem:[#allocation5 + $0x168] sm:$0xff] %v1322
    %1387 = vst [vmem:[#allocation5 + $0x170] sm:$0xff] %v1323
    %1388 = vst [vmem:[#allocation5 + $0x178] sm:$0xff] %v1324
    %1389 = vst [vmem:[#allocation5 + $0x180] sm:$0xff] %v1325
    %1390 = vst [vmem:[#allocation5 + $0x188] sm:$0xff] %v1326
    %1391 = vst [vmem:[#allocation5 + $0x190] sm:$0xff] %v1327
    %1392 = vst [vmem:[#allocation5 + $0x198] sm:$0xff] %v1328
    %1393 = vst [vmem:[#allocation5 + $0x1a0] sm:$0xff] %v1329
    %1394 = vst [vmem:[#allocation5 + $0x1a8] sm:$0xff] %v1330
    %1395 = vst [vmem:[#allocation5 + $0x1b0] sm:$0xff] %v1331
    %1396 = vst [vmem:[#allocation5 + $0x1b8] sm:$0xff] %v1332
    %1397 = vst [vmem:[#allocation5 + $0x1c0] sm:$0xff] %v1333
    %1398 = vst [vmem:[#allocation5 + $0x1c8] sm:$0xff] %v1334
    %1399 = vst [vmem:[#allocation5 + $0x1d0] sm:$0xff] %v1335
    %1400 = vst [vmem:[#allocation5 + $0x1d8] sm:$0xff] %v1336
    %1401 = vst [vmem:[#allocation5 + $0x1e0] sm:$0xff] %v1337
    %1402 = vst [vmem:[#allocation5 + $0x1e8] sm:$0xff] %v1338
    %1403 = vst [vmem:[#allocation5 + $0x1f0] sm:$0xff] %v1339
    %1404 = vst [vmem:[#allocation5 + $0x1f8] sm:$0xff] %v1340
    // Predicated region
    $region34: #{generator_forward.1} parent=1 // pred_check
      _
    $region35: #{generator_forward.1} parent=1 // pred_check_branch
      %1406 = sbr.rel (0) target = $region37
    $region36: #{generator_forward.1} parent=1 // pred_region
      %s1408 = ssub.s32 8192, 8192
      %1409 = vsyncadd [#allocation4], %s1408
      %s1410 = sshll.u32 [#allocation5], 4
      %s1411 = int_to_ptr.vmem [resolvable:$true] %s1410
      %1416 = dma.vmem_to_hbm [thread:$0]  %s1411, 8192, %s7, [#allocation4], 256, 256, 16
    $region37: #{generator_forward.1} parent=1 // pred_fallthru
      _
    // Predicated region
    $region38: #{generator_forward.1} parent=1 // pred_check
      _
    $region39: #{generator_forward.1} parent=1 // pred_check_branch
      %1418 = sbr.rel (0) target = $region41
    $region40: #{generator_forward.1} parent=1 // pred_region
      %1419 = dma.done [#allocation4], 8192
    $region41: #{generator_forward.1} parent=1 // pred_fallthru
      _
    %1420 = vsyncpa [#allocation3], 1
    %1421 = vsyncpa [#allocation4], 1

</llo_original>
